<compile_context>
chip_gen: v7x
topology: tpu7x:2x2x1
jax: 0.10.0
libtpu: 0.0.40
codegen_flags: <defaults>
</compile_context>

<pallas_src>
import functools
import math

import jax
import jax.numpy as jnp
from jax import lax
from jax.experimental import pallas as pl
from jax.experimental.pallas import tpu as pltpu


def _sin_pos_emb_kernel(x_ref, o_ref, *, half_dim, neg_log_scale):
    """One grid step = TB batch rows.

    x_ref: (TB, 1)        timesteps (f32)
    o_ref: (TB, 2*half_dim) sinusoidal embedding
    """
    x = x_ref[...]                                            # (TB, 1)

    # Frequency table, rebuilt in-register (half_dim elems -> negligible).
    k = lax.broadcasted_iota(jnp.int32, (1, half_dim), 1).astype(jnp.float32)
    freqs = jnp.exp(k * neg_log_scale)                        # (1, half_dim)

    emb = x * freqs                                           # (TB, half_dim)

    # Single lane-dense (TB, dim) result -> one unmasked store.
    out = jnp.concatenate([jnp.sin(emb), jnp.cos(emb)], axis=-1)
    o_ref[...] = out.astype(o_ref.dtype)


def sinusoidal_pos_emb(x, dim, *, max_block_b=512):
    """x: (B,) timesteps; returns (B, dim) f32 embedding."""
    assert dim % 2 == 0 and dim >= 4
    B = x.shape[0]
    half_dim = dim // 2
    neg_log_scale = -(math.log(10000.0) / (half_dim - 1))

    def _round_up(a, m):
        return (a + m - 1) // m * m

    # TB batch rows per grid step: sublane-aligned (multiple of 8); for small B
    # everything fits in one grid step, for large B blocks of <=512 rows.
    block_b = min(max_block_b, _round_up(B, 8))
    B_pad = _round_up(B, block_b)

    x2 = jnp.pad(x.astype(jnp.float32), (0, B_pad - B)).reshape(B_pad, 1)

    kernel = functools.partial(
        _sin_pos_emb_kernel, half_dim=half_dim, neg_log_scale=neg_log_scale)

    out = pl.pallas_call(
        kernel,
        out_shape=jax.ShapeDtypeStruct((B_pad, dim), jnp.float32),
        grid_spec=pltpu.PrefetchScalarGridSpec(
            num_scalar_prefetch=0,
            grid=(B_pad // block_b,),
            in_specs=[pl.BlockSpec((block_b, 1), lambda i: (i, 0))],
            out_specs=pl.BlockSpec((block_b, dim), lambda i: (i, 0)),
        ),
        compiler_params=pltpu.CompilerParams(
            dimension_semantics=("parallel",)),   # megacore-friendly on v7x
    )(x2)
    return out[:B]


def _reference(x, dim):
    """Pure-JAX reference reproducing the PyTorch forward semantics."""
    half_dim = dim // 2
    scale = math.log(10000.0) / (half_dim - 1)
    freqs = jnp.exp(jnp.arange(half_dim, dtype=jnp.float32) * -scale)
    emb = x.astype(jnp.float32)[:, None] * freqs[None, :]
    return jnp.concatenate([jnp.sin(emb), jnp.cos(emb)], axis=-1)


if __name__ == "__main__":
    # Small shapes consistent with the module: a batch of scalar timesteps,
    # embedding dim = 128 (lane-dense output block).
    batch, dim = 16, 128

    key = jax.random.PRNGKey(0)
    x = jax.random.uniform(key, (batch,), dtype=jnp.float32,
                           minval=0.0, maxval=100.0)

    out = sinusoidal_pos_emb(x, dim)
    out = jax.block_until_ready(out)

    ref = _reference(x, dim)
    assert out.shape == (batch, dim)
    assert jnp.allclose(out, ref, atol=1e-4, rtol=1e-4), \
        float(jnp.abs(out - ref).max())

    print("KERNEL_OK")
</pallas_src>

<mosaic_0001>
module attributes {stable_mosaic.version = 11 : i64} {
  func.func @_sin_pos_emb_kernel(%arg0: i32, %arg1: memref<16x1xf32, #tpu.memory_space<vmem>>, %arg2: memref<16x128xf32, #tpu.memory_space<vmem>>) attributes {dimension_semantics = [#tpu.dimension_semantics<parallel>], iteration_bounds = array<i64: 1>, scalar_prefetch = 0 : i64, scratch_operands = 0 : i64, tpu.core_type = #tpu.core_type<tc>, window_params = [{transform_indices = @transform_0, window_bounds = array<i64: 16, 1>}, {transform_indices = @transform_1, window_bounds = array<i64: 16, 128>}]} {
    %c0 = arith.constant 0 : index
    %c0_0 = arith.constant 0 : index
    %0 = vector.load %arg1[%c0, %c0_0] : memref<16x1xf32, #tpu.memory_space<vmem>>, vector<16x1xf32>
    %1 = tpu.iota {dimensions = array<i32: 1>} : vector<1x64xi32>
    %2 = arith.sitofp %1 : vector<1x64xi32> to vector<1x64xf32>
    %cst = arith.constant -0.146195874 : f32
    %3 = vector.broadcast %cst : f32 to vector<1x64xf32>
    %4 = arith.mulf %2, %3 : vector<1x64xf32>
    %5 = math.exp %4 : vector<1x64xf32>
    %6 = vector.broadcast %0 : vector<16x1xf32> to vector<16x64xf32>
    %7 = vector.broadcast %5 : vector<1x64xf32> to vector<16x64xf32>
    %8 = arith.mulf %6, %7 : vector<16x64xf32>
    %9 = math.sin %8 : vector<16x64xf32>
    %10 = math.cos %8 : vector<16x64xf32>
    %11 = tpu.concatenate %9, %10 in 1 : vector<16x64xf32>, vector<16x64xf32> -> vector<16x128xf32>
    %c0_1 = arith.constant 0 : index
    %c0_2 = arith.constant 0 : index
    %12 = vector.load %arg2[%c0_1, %c0_2] : memref<16x128xf32, #tpu.memory_space<vmem>>, vector<16x128xf32>
    tpu.vector_store %arg2[%c0_1, %c0_2], %11 {strides = array<i32>} : memref<16x128xf32, #tpu.memory_space<vmem>>, vector<16x128xf32>,
    return
  }
  func.func @transform_0(%arg0: i32) -> (i32, i32) {
    %c0_i32 = arith.constant 0 : i32
    %c0_i32_0 = arith.constant 0 : i32
    return %arg0, %c0_i32 : i32, i32
  }
  func.func @transform_1(%arg0: i32) -> (i32, i32) {
    %c0_i32 = arith.constant 0 : i32
    %c0_i32_0 = arith.constant 0 : i32
    return %arg0, %c0_i32 : i32, i32
  }
}

</mosaic_0001>

<llo_original>
// kernel: tpu_custom_call.1
$region0: #{tpu_custom_call.1}
  #allocation0 [shape = 'u32[]', space=smem, size = 0x4, offset = 0x4, fixed_abs, tag = 'smem constant byte address 0x4 - core index']
  #allocation1 [shape = 'u32[144,128]{1,0:T(1,128)}', space=vmem, size = 0x12000, scoped, tag = 'internal scratch']
  %s0 = inlined_call_operand.vmem [shape: f32[16,1], index: 0, kind: input, shape index: {}]
  %s1 = inlined_call_operand.hbm [shape: f32[16,128], index: 1, kind: output, shape index: {}]
  %s2 = sld [smem:[#allocation0]]
  $region14: #{tpu_custom_call.1} parent=0
    _
  %s4 = ssub.s32 1, %s2
  %s5 = scalar_select 0, %s4, %s2
  $region1: #{tpu_custom_call.1} parent=0
    #allocation2 [shape = 'u8[8192]{0}', space=vmem, size = 0x2000, scoped, tag = 'output window, operand 0, single buffered']
    #allocation3 [shape = 's32[1]{0}', space=sflag, size = 0x4, scoped, tag = 'scoped memory for tpu_custom_call.1']
    %6 = vsyncpa [#allocation3], 0
    // Predicated region
    $region2: #{tpu_custom_call.1} parent=1 // pred_check
      _
    $region3: #{tpu_custom_call.1} parent=1 // pred_check_branch
      %8 = sbr.rel (0) target = $region5
    $region4: #{tpu_custom_call.1} parent=1 // pred_region
      _
    $region5: #{tpu_custom_call.1} parent=1 // pred_fallthru
      _
    %v9 = vld [vmem:[%s0] sm:$0xff]
    %v10 = vld [vmem:[%s0 + $0x8] sm:$0xff]
    %v11 = vlaneseq
    %v12 = vand.u32 %v11, 127
    %v13 = vcvt.s32.f32 %v12
    %v14 = vmul.f32 %v13, -0.14619587
    %v15 = vmul.f32 %v14, 1.442695
    %v16 = vpow.pop %v15
    %18 = vset.pattern.permute.xlu0 0
    %19 = vperm.xlu0 %18, %v9
    %v20 = vpop.permute.xlu0 %19
    %23 = vset.pattern.permute.xlu0 0
    %24 = vperm.xlu0 %23, %v10
    %v25 = vpop.permute.xlu0 %24
    %v27 = vmul.f32 %v20, %v16
    %v28 = vmul.f32 %v25, %v16
    %v29 = vand.u32 2147483647, %v27
    %vm30 = vcmp.le.f32.partialorder %v29, 0.7853982
    %vm31 = vcmp.lt.s32.totalorder %v27, 0
    %v32 = vand.u32 %v27, 2139095040
    %v33 = vshrl.u32 %v32, 23
    %v34 = vsub.s32 %v33, 127
    %v35 = vand.u32 2147483647, %v27
    %v36 = vand.u32 %v35, 8388607
    %v37 = vor.u32 %v36, 8388608
    %v38 = vsub.s32 0, %v37
    %v39 = vadd.s32 %v34, 1
    %vm40 = vcmp.gt.s32.totalorder %v39, 0
    %v41 = vsel %vm40, %v39, 0
    %v42 = vshrl.u32 %v41, 5
    %v43 = vand.u32 %v41, 31
    %v44 = vsub.s32 32, %v43
    %v45 = vshrl.u32 683565275, %v44
    %v46 = vshll.u32 683565275, %v43
    %v47 = vshrl.u32 2475754826, %v44
    %v48 = vor.u32 %v46, %v47
    %v49 = vshll.u32 2475754826, %v43
    %v50 = vshrl.u32 2131351028, %v44
    %v51 = vor.u32 %v49, %v50
    %v52 = vshll.u32 2131351028, %v43
    %v53 = vshrl.u32 2102212464, %v44
    %v54 = vor.u32 %v52, %v53
    %v55 = vshll.u32 2102212464, %v43
    %v56 = vshrl.u32 920167782, %v44
    %v57 = vor.u32 %v55, %v56
    %v58 = vshll.u32 920167782, %v43
    %v59 = vshrl.u32 1326507024, %v44
    %v60 = vor.u32 %v58, %v59
    %vm61 = vcmp.lt.s32.totalorder %v42, 1
    %vm62 = vcmp.lt.s32.totalorder %v42, 2
    %vm63 = vcmp.lt.s32.totalorder %v42, 3
    %vm64 = vcmp.lt.s32.totalorder %v42, 4
    %v65 = vsel %vm61, %v45, %v48
    %v66 = vsel %vm64, %v54, 2102212464
    %v67 = vsel %vm63, %v51, %v66
    %v68 = vsel %vm62, %v65, %v67
    %v69 = vsel %vm61, %v48, %v51
    %v70 = vsel %vm64, %v57, 920167782
    %v71 = vsel %vm63, %v54, %v70
    %v72 = vsel %vm62, %v69, %v71
    %v73 = vsel %vm61, %v51, %v54
    %v74 = vsel %vm64, %v60, 1326507024
    %v75 = vsel %vm63, %v57, %v74
    %v76 = vsel %vm62, %v73, %v75
    %v77 = vshll.u32 %v37, 8
    %v78 = vmul.u32.u64.compose %v77, %v76
    %v79 = vextract.low.u32 %v78
    %v80 = vextract.high.u32 %v78
    %v81 = vmul.u32.u64.compose %v77, %v72
    %v82 = vextract.low.u32 %v81
    %v83 = vextract.high.u32 %v81
    %v84 = vmul.u32 %v77, %v68
    %v85 = vadd.s32 %v80, %v82
    %vm86 = vc.u32 %v80, %v82
    %v87 = vadd.s32 %v83, 1
    %v88 = vsel %vm86, %v87, %v83
    %v89 = vadd.s32 %v84, %v88
    %v90 = vadd.s32 %v89, 536870912
    %v91 = vshrl.u32 %v90, 30
    %v92 = vshll.u32 %v91, 30
    %v93 = vsub.s32 %v89, %v92
    %vm94 = vcmp.lt.s32.totalorder %v93, 0
    %v95 = vsub.s32 0, %v93
    %v96 = vsel %vm94, %v95, %v93
    %v97 = vclz %v96
    %v98 = vsub.s32 %v97, 2
    %vm99 = vcmp.gt.s32.totalorder 0, %v98
    %v100 = vsel %vm99, 0, %v98
    %v101 = vsub.s32 32, %v100
    %v102 = vshll.u32 %v93, %v100
    %v103 = vshrl.u32 %v85, %v101
    %v104 = vor.u32 %v102, %v103
    %v105 = vsub.s32 4294967266, %v100
    %v106 = vadd.s32 %v105, 127
    %v107 = vshll.u32 %v106, 23
    %v108 = vor.u32 4788187, %v107
    %v109 = vand.u32 2147483647, %v108
    %v111 = vcvt.s32.f32 %v104
    %v112 = vmul.f32 %v111, %v109
    %v113 = vxor.u32 %v112, 2147483648
    %v114 = vsel %vm31, %v113, %v112
    %v115 = vsub.s32 4, %v91
    %v116 = vsel %vm31, %v115, %v91
    %v117 = vsel %vm30, %v27, %v114
    %v118 = vsel %vm30, 0, %v116
    %v119 = vcosq.f32.pop %v117
    %v120 = vsinq.f32.pop %v117
    %vm121 = vweird.f32 %v27
    %v122 = vadd.s32 %v118, 3
    %v123 = vand.u32 %v122, 3
    %vm124 = vcmp.lt.s32.totalorder %v123, 2
    %vm125 = vcmp.eq.s32.totalorder %v123, 0
    %v126 = vxor.u32 %v120, 2147483648
    %v127 = vsel %vm125, %v119, %v126
    %vm128 = vcmp.eq.s32.totalorder %v123, 2
    %v129 = vxor.u32 %v119, 2147483648
    %v130 = vsel %vm128, %v129, %v120
    %v131 = vsel %vm124, %v127, %v130
    %v132 = vsel %vm121, nan, %v131
    %v133 = vand.u32 2147483647, %v28
    %vm134 = vcmp.le.f32.partialorder %v133, 0.7853982
    %vm135 = vcmp.lt.s32.totalorder %v28, 0
    %v136 = vand.u32 %v28, 2139095040
    %v137 = vshrl.u32 %v136, 23
    %v138 = vsub.s32 %v137, 127
    %v139 = vand.u32 2147483647, %v28
    %v140 = vand.u32 %v139, 8388607
    %v141 = vor.u32 %v140, 8388608
    %v142 = vsub.s32 0, %v141
    %v143 = vadd.s32 %v138, 1
    %vm144 = vcmp.gt.s32.totalorder %v143, 0
    %v145 = vsel %vm144, %v143, 0
    %v146 = vshrl.u32 %v145, 5
    %v147 = vand.u32 %v145, 31
    %v148 = vsub.s32 32, %v147
    %v149 = vshrl.u32 683565275, %v148
    %v150 = vshll.u32 683565275, %v147
    %v151 = vshrl.u32 2475754826, %v148
    %v152 = vor.u32 %v150, %v151
    %v153 = vshll.u32 2475754826, %v147
    %v154 = vshrl.u32 2131351028, %v148
    %v155 = vor.u32 %v153, %v154
    %v156 = vshll.u32 2131351028, %v147
    %v157 = vshrl.u32 2102212464, %v148
    %v158 = vor.u32 %v156, %v157
    %v159 = vshll.u32 2102212464, %v147
    %v160 = vshrl.u32 920167782, %v148
    %v161 = vor.u32 %v159, %v160
    %v162 = vshll.u32 920167782, %v147
    %v163 = vshrl.u32 1326507024, %v148
    %v164 = vor.u32 %v162, %v163
    %vm165 = vcmp.lt.s32.totalorder %v146, 1
    %vm166 = vcmp.lt.s32.totalorder %v146, 2
    %vm167 = vcmp.lt.s32.totalorder %v146, 3
    %vm168 = vcmp.lt.s32.totalorder %v146, 4
    %v169 = vsel %vm165, %v149, %v152
    %v170 = vsel %vm168, %v158, 2102212464
    %v171 = vsel %vm167, %v155, %v170
    %v172 = vsel %vm166, %v169, %v171
    %v173 = vsel %vm165, %v152, %v155
    %v174 = vsel %vm168, %v161, 920167782
    %v175 = vsel %vm167, %v158, %v174
    %v176 = vsel %vm166, %v173, %v175
    %v177 = vsel %vm165, %v155, %v158
    %v178 = vsel %vm168, %v164, 1326507024
    %v179 = vsel %vm167, %v161, %v178
    %v180 = vsel %vm166, %v177, %v179
    %v181 = vshll.u32 %v141, 8
    %v182 = vmul.u32.u64.compose %v181, %v180
    %v183 = vextract.low.u32 %v182
    %v184 = vextract.high.u32 %v182
    %v185 = vmul.u32.u64.compose %v181, %v176
    %v186 = vextract.low.u32 %v185
    %v187 = vextract.high.u32 %v185
    %v188 = vmul.u32 %v181, %v172
    %v189 = vadd.s32 %v184, %v186
    %vm190 = vc.u32 %v184, %v186
    %v191 = vadd.s32 %v187, 1
    %v192 = vsel %vm190, %v191, %v187
    %v193 = vadd.s32 %v188, %v192
    %v194 = vadd.s32 %v193, 536870912
    %v195 = vshrl.u32 %v194, 30
    %v196 = vshll.u32 %v195, 30
    %v197 = vsub.s32 %v193, %v196
    %vm198 = vcmp.lt.s32.totalorder %v197, 0
    %v199 = vsub.s32 0, %v197
    %v200 = vsel %vm198, %v199, %v197
    %v201 = vclz %v200
    %v202 = vsub.s32 %v201, 2
    %vm203 = vcmp.gt.s32.totalorder 0, %v202
    %v204 = vsel %vm203, 0, %v202
    %v205 = vsub.s32 32, %v204
    %v206 = vshll.u32 %v197, %v204
    %v207 = vshrl.u32 %v189, %v205
    %v208 = vor.u32 %v206, %v207
    %v209 = vsub.s32 4294967266, %v204
    %v210 = vadd.s32 %v209, 127
    %v211 = vshll.u32 %v210, 23
    %v212 = vor.u32 4788187, %v211
    %v213 = vand.u32 2147483647, %v212
    %v215 = vcvt.s32.f32 %v208
    %v216 = vmul.f32 %v215, %v213
    %v217 = vxor.u32 %v216, 2147483648
    %v218 = vsel %vm135, %v217, %v216
    %v219 = vsub.s32 4, %v195
    %v220 = vsel %vm135, %v219, %v195
    %v221 = vsel %vm134, %v28, %v218
    %v222 = vsel %vm134, 0, %v220
    %v223 = vcosq.f32.pop %v221
    %v224 = vsinq.f32.pop %v221
    %vm225 = vweird.f32 %v28
    %v226 = vadd.s32 %v222, 3
    %v227 = vand.u32 %v226, 3
    %vm228 = vcmp.lt.s32.totalorder %v227, 2
    %vm229 = vcmp.eq.s32.totalorder %v227, 0
    %v230 = vxor.u32 %v224, 2147483648
    %v231 = vsel %vm229, %v223, %v230
    %vm232 = vcmp.eq.s32.totalorder %v227, 2
    %v233 = vxor.u32 %v223, 2147483648
    %v234 = vsel %vm232, %v233, %v224
    %v235 = vsel %vm228, %v231, %v234
    %v236 = vsel %vm225, nan, %v235
    %v237 = vand.u32 2147483647, %v27
    %vm238 = vcmp.le.f32.partialorder %v237, 0.7853982
    %vm239 = vcmp.lt.s32.totalorder %v27, 0
    %v240 = vand.u32 %v27, 2139095040
    %v241 = vshrl.u32 %v240, 23
    %v242 = vsub.s32 %v241, 127
    %v243 = vand.u32 2147483647, %v27
    %v244 = vand.u32 %v243, 8388607
    %v245 = vor.u32 %v244, 8388608
    %v246 = vsub.s32 0, %v245
    %v247 = vadd.s32 %v242, 1
    %vm248 = vcmp.gt.s32.totalorder %v247, 0
    %v249 = vsel %vm248, %v247, 0
    %v250 = vshrl.u32 %v249, 5
    %v251 = vand.u32 %v249, 31
    %v252 = vsub.s32 32, %v251
    %v253 = vshrl.u32 683565275, %v252
    %v254 = vshll.u32 683565275, %v251
    %v255 = vshrl.u32 2475754826, %v252
    %v256 = vor.u32 %v254, %v255
    %v257 = vshll.u32 2475754826, %v251
    %v258 = vshrl.u32 2131351028, %v252
    %v259 = vor.u32 %v257, %v258
    %v260 = vshll.u32 2131351028, %v251
    %v261 = vshrl.u32 2102212464, %v252
    %v262 = vor.u32 %v260, %v261
    %v263 = vshll.u32 2102212464, %v251
    %v264 = vshrl.u32 920167782, %v252
    %v265 = vor.u32 %v263, %v264
    %v266 = vshll.u32 920167782, %v251
    %v267 = vshrl.u32 1326507024, %v252
    %v268 = vor.u32 %v266, %v267
    %vm269 = vcmp.lt.s32.totalorder %v250, 1
    %vm270 = vcmp.lt.s32.totalorder %v250, 2
    %vm271 = vcmp.lt.s32.totalorder %v250, 3
    %vm272 = vcmp.lt.s32.totalorder %v250, 4
    %v273 = vsel %vm269, %v253, %v256
    %v274 = vsel %vm272, %v262, 2102212464
    %v275 = vsel %vm271, %v259, %v274
    %v276 = vsel %vm270, %v273, %v275
    %v277 = vsel %vm269, %v256, %v259
    %v278 = vsel %vm272, %v265, 920167782
    %v279 = vsel %vm271, %v262, %v278
    %v280 = vsel %vm270, %v277, %v279
    %v281 = vsel %vm269, %v259, %v262
    %v282 = vsel %vm272, %v268, 1326507024
    %v283 = vsel %vm271, %v265, %v282
    %v284 = vsel %vm270, %v281, %v283
    %v285 = vshll.u32 %v245, 8
    %v286 = vmul.u32.u64.compose %v285, %v284
    %v287 = vextract.low.u32 %v286
    %v288 = vextract.high.u32 %v286
    %v289 = vmul.u32.u64.compose %v285, %v280
    %v290 = vextract.low.u32 %v289
    %v291 = vextract.high.u32 %v289
    %v292 = vmul.u32 %v285, %v276
    %v293 = vadd.s32 %v288, %v290
    %vm294 = vc.u32 %v288, %v290
    %v295 = vadd.s32 %v291, 1
    %v296 = vsel %vm294, %v295, %v291
    %v297 = vadd.s32 %v292, %v296
    %v298 = vadd.s32 %v297, 536870912
    %v299 = vshrl.u32 %v298, 30
    %v300 = vshll.u32 %v299, 30
    %v301 = vsub.s32 %v297, %v300
    %vm302 = vcmp.lt.s32.totalorder %v301, 0
    %v303 = vsub.s32 0, %v301
    %v304 = vsel %vm302, %v303, %v301
    %v305 = vclz %v304
    %v306 = vsub.s32 %v305, 2
    %vm307 = vcmp.gt.s32.totalorder 0, %v306
    %v308 = vsel %vm307, 0, %v306
    %v309 = vsub.s32 32, %v308
    %v310 = vshll.u32 %v301, %v308
    %v311 = vshrl.u32 %v293, %v309
    %v312 = vor.u32 %v310, %v311
    %v313 = vsub.s32 4294967266, %v308
    %v314 = vadd.s32 %v313, 127
    %v315 = vshll.u32 %v314, 23
    %v316 = vor.u32 4788187, %v315
    %v317 = vand.u32 2147483647, %v316
    %v319 = vcvt.s32.f32 %v312
    %v320 = vmul.f32 %v319, %v317
    %v321 = vxor.u32 %v320, 2147483648
    %v322 = vsel %vm239, %v321, %v320
    %v323 = vsub.s32 4, %v299
    %v324 = vsel %vm239, %v323, %v299
    %v325 = vsel %vm238, %v27, %v322
    %v326 = vsel %vm238, 0, %v324
    %v327 = vcosq.f32.pop %v325
    %v328 = vsinq.f32.pop %v325
    %vm329 = vweird.f32 %v27
    %v330 = vand.u32 %v326, 3
    %vm331 = vcmp.lt.s32.totalorder %v330, 2
    %vm332 = vcmp.eq.s32.totalorder %v330, 0
    %v333 = vxor.u32 %v328, 2147483648
    %v334 = vsel %vm332, %v327, %v333
    %vm335 = vcmp.eq.s32.totalorder %v330, 2
    %v336 = vxor.u32 %v327, 2147483648
    %v337 = vsel %vm335, %v336, %v328
    %v338 = vsel %vm331, %v334, %v337
    %v339 = vsel %vm329, nan, %v338
    %v340 = vand.u32 2147483647, %v28
    %vm341 = vcmp.le.f32.partialorder %v340, 0.7853982
    %vm342 = vcmp.lt.s32.totalorder %v28, 0
    %v343 = vand.u32 %v28, 2139095040
    %v344 = vshrl.u32 %v343, 23
    %v345 = vsub.s32 %v344, 127
    %v346 = vand.u32 2147483647, %v28
    %v347 = vand.u32 %v346, 8388607
    %v348 = vor.u32 %v347, 8388608
    %v349 = vsub.s32 0, %v348
    %v350 = vadd.s32 %v345, 1
    %vm351 = vcmp.gt.s32.totalorder %v350, 0
    %v352 = vsel %vm351, %v350, 0
    %v353 = vshrl.u32 %v352, 5
    %v354 = vand.u32 %v352, 31
    %v355 = vsub.s32 32, %v354
    %v356 = vshrl.u32 683565275, %v355
    %v357 = vshll.u32 683565275, %v354
    %v358 = vshrl.u32 2475754826, %v355
    %v359 = vor.u32 %v357, %v358
    %v360 = vshll.u32 2475754826, %v354
    %v361 = vshrl.u32 2131351028, %v355
    %v362 = vor.u32 %v360, %v361
    %v363 = vshll.u32 2131351028, %v354
    %v364 = vshrl.u32 2102212464, %v355
    %v365 = vor.u32 %v363, %v364
    %v366 = vshll.u32 2102212464, %v354
    %v367 = vshrl.u32 920167782, %v355
    %v368 = vor.u32 %v366, %v367
    %v369 = vshll.u32 920167782, %v354
    %v370 = vshrl.u32 1326507024, %v355
    %v371 = vor.u32 %v369, %v370
    %vm372 = vcmp.lt.s32.totalorder %v353, 1
    %vm373 = vcmp.lt.s32.totalorder %v353, 2
    %vm374 = vcmp.lt.s32.totalorder %v353, 3
    %vm375 = vcmp.lt.s32.totalorder %v353, 4
    %v376 = vsel %vm372, %v356, %v359
    %v377 = vsel %vm375, %v365, 2102212464
    %v378 = vsel %vm374, %v362, %v377
    %v379 = vsel %vm373, %v376, %v378
    %v380 = vsel %vm372, %v359, %v362
    %v381 = vsel %vm375, %v368, 920167782
    %v382 = vsel %vm374, %v365, %v381
    %v383 = vsel %vm373, %v380, %v382
    %v384 = vsel %vm372, %v362, %v365
    %v385 = vsel %vm375, %v371, 1326507024
    %v386 = vsel %vm374, %v368, %v385
    %v387 = vsel %vm373, %v384, %v386
    %v388 = vshll.u32 %v348, 8
    %v389 = vmul.u32.u64.compose %v388, %v387
    %v390 = vextract.low.u32 %v389
    %v391 = vextract.high.u32 %v389
    %v392 = vmul.u32.u64.compose %v388, %v383
    %v393 = vextract.low.u32 %v392
    %v394 = vextract.high.u32 %v392
    %v395 = vmul.u32 %v388, %v379
    %v396 = vadd.s32 %v391, %v393
    %vm397 = vc.u32 %v391, %v393
    %v398 = vadd.s32 %v394, 1
    %v399 = vsel %vm397, %v398, %v394
    %v400 = vadd.s32 %v395, %v399
    %v401 = vadd.s32 %v400, 536870912
    %v402 = vshrl.u32 %v401, 30
    %v403 = vshll.u32 %v402, 30
    %v404 = vsub.s32 %v400, %v403
    %vm405 = vcmp.lt.s32.totalorder %v404, 0
    %v406 = vsub.s32 0, %v404
    %v407 = vsel %vm405, %v406, %v404
    %v408 = vclz %v407
    %v409 = vsub.s32 %v408, 2
    %vm410 = vcmp.gt.s32.totalorder 0, %v409
    %v411 = vsel %vm410, 0, %v409
    %v412 = vsub.s32 32, %v411
    %v413 = vshll.u32 %v404, %v411
    %v414 = vshrl.u32 %v396, %v412
    %v415 = vor.u32 %v413, %v414
    %v416 = vsub.s32 4294967266, %v411
    %v417 = vadd.s32 %v416, 127
    %v418 = vshll.u32 %v417, 23
    %v419 = vor.u32 4788187, %v418
    %v420 = vand.u32 2147483647, %v419
    %v422 = vcvt.s32.f32 %v415
    %v423 = vmul.f32 %v422, %v420
    %v424 = vxor.u32 %v423, 2147483648
    %v425 = vsel %vm342, %v424, %v423
    %v426 = vsub.s32 4, %v402
    %v427 = vsel %vm342, %v426, %v402
    %v428 = vsel %vm341, %v28, %v425
    %v429 = vsel %vm341, 0, %v427
    %v430 = vcosq.f32.pop %v428
    %v431 = vsinq.f32.pop %v428
    %vm432 = vweird.f32 %v28
    %v433 = vand.u32 %v429, 3
    %vm434 = vcmp.lt.s32.totalorder %v433, 2
    %vm435 = vcmp.eq.s32.totalorder %v433, 0
    %v436 = vxor.u32 %v431, 2147483648
    %v437 = vsel %vm435, %v430, %v436
    %vm438 = vcmp.eq.s32.totalorder %v433, 2
    %v439 = vxor.u32 %v430, 2147483648
    %v440 = vsel %vm438, %v439, %v431
    %v441 = vsel %vm434, %v437, %v440
    %v442 = vsel %vm432, nan, %v441
    %445 = vrot.lane.b32.xlu0 %v339, 64
    %v446 = vpop.permute.xlu0 %445
    %447 = vrot.lane.b32.xlu0 %v442, 64
    %v448 = vpop.permute.xlu0 %447
    %vm451 = vcmask 523264
    %v452 = vsel %vm451, %v132, %v446
    %v453 = vsel %vm451, %v236, %v448
    %454 = vst [vmem:[#allocation2] sm:$0xff] %v452
    %455 = vst [vmem:[#allocation2 + $0x8] sm:$0xff] %v453
    // Predicated region
    $region6: #{tpu_custom_call.1} parent=1 // pred_check
      _
    $region7: #{tpu_custom_call.1} parent=1 // pred_check_branch
      %457 = sbr.rel (0) target = $region9
    $region8: #{tpu_custom_call.1} parent=1 // pred_region
      %s459 = ssub.s32 256, 256
      %460 = vsyncadd [#allocation3], %s459
      %s461 = sshll.u32 [#allocation2], 4
      %s462 = int_to_ptr.vmem [resolvable:$true] %s461
      %467 = dma.vmem_to_hbm [thread:$0]  %s462, 256, %s1, [#allocation3], 128, 128, 8
    $region9: #{tpu_custom_call.1} parent=1 // pred_fallthru
      _
    // Predicated region
    $region10: #{tpu_custom_call.1} parent=1 // pred_check
      _
    $region11: #{tpu_custom_call.1} parent=1 // pred_check_branch
      %469 = sbr.rel (0) target = $region13
    $region12: #{tpu_custom_call.1} parent=1 // pred_region
      %470 = dma.done [#allocation3], 256
    $region13: #{tpu_custom_call.1} parent=1 // pred_fallthru
      _
    %471 = vsyncpa [#allocation3], 1

</llo_original>
